<compile_context>
chip_gen: v5e
topology: v5e:2x2
jax: 0.10.0
libtpu: 0.0.40
codegen_flags: <defaults>
</compile_context>

<pallas_src>
import math
from functools import partial

import jax
import jax.numpy as jnp
from jax import lax
from jax.experimental import pallas as pl
from jax.experimental.pallas import tpu as pltpu


def convkb_kernel(x_ref, wce_ref, bce_ref, wf_ref, bf_ref, o_ref, *, compute_dtype):
    # x:   (TB, S*D)   caller dtype (f32/bf16)
    # wce: (S*D, OC*D) compute_dtype (block-expanded conv weight)
    # bce: (1, OC*D)   f32 (conv bias, broadcast over d)
    # wf:  (1, OC*D)   compute_dtype (fc weight, oc-major / d-minor like PyTorch)
    # bf:  (1, 1)      f32
    # o:   (1, TB)     f32 (lane-dense: batch on lanes)
    xb = x_ref[...].astype(compute_dtype)

    # "1xL conv" as a single lane-dense MXU matmul (f32 accumulation):
    #   h[b, oc*D+d] = sum_s Wc[oc, s] * x[b, s, d]
    h = jnp.dot(xb, wce_ref[...], preferred_element_type=jnp.float32)  # (TB, OC*D)

    # conv bias + ReLU: one full-width VPU add/max.
    h = jnp.maximum(h + bce_ref[...], 0.0)
    # TODO(synk): dropout is identity here (eval-mode semantics); training-mode
    #             dropout would need pltpu.prng_seed / prng_random_bits masking.

    # Fully-connected layer: one K=OC*D contraction, lane-dense (1, TB) output.
    hb = h.astype(compute_dtype)
    out = lax.dot_general(
        wf_ref[...], hb,
        dimension_numbers=(((1,), (1,)), ((), ())),
        preferred_element_type=jnp.float32,
    )  # (1, TB)
    o_ref[...] = out + bf_ref[...]


def _choose_batch_tile(batch, k, n, x_itemsize, compute_itemsize,
                       cap=4096, budget_bytes=12 << 20):
    """Pick the batch tile TB.

    Rules:
      * TB <= batch, and TB is a multiple of 128 (or TB == batch when batch < 128)
        so every block dim is either (8,128)-aligned or the full array dim.
      * Double-buffered x block + in-kernel temporaries stay under a conservative
        VMEM budget (v5e's 16 MiB default scoped limit is the tightest target).
      * Tiles are balanced across grid steps to minimise ragged-tail waste.
    """
    if batch < 128:
        return batch
    per_row = (2 * k * x_itemsize              # double-buffered x block
               + k * compute_itemsize          # bf16 cast of x
               + n * 4 + n * compute_itemsize  # h (f32) + cast of h
               + 16)
    tb_max = min(cap, max(128, (budget_bytes // per_row) // 128 * 128))
    g = -(-batch // tb_max)
    tb_balanced = ((-(-batch // g) + 127) // 128) * 128
    return min(tb_balanced, (batch // 128) * 128, tb_max)


def convkb_forward(x, conv_w, conv_b, fc_w, fc_b, *, compute_dtype=jnp.bfloat16):
    """ConvKB forward.

    x: (B, S, D); conv_w: (OC, 1, 1, S); conv_b: (OC,); fc_w: (1, OC*D); fc_b: (1,).
    compute_dtype: matmul operand dtype (bf16 default; jnp.float32 for exact
    PyTorch-style f32 matmuls).  Accumulation is always f32.
    """
    B, S, D = x.shape
    OC = conv_w.shape[0]
    K = S * D       # contraction width of the conv matmul
    N = OC * D      # flattened feature width (oc-major, d-minor, like PyTorch)

    compute_dtype = jnp.dtype(compute_dtype)

    # Block-expanded conv weight: wce[s*D+d, oc*D+d'] = wc[oc, s] * (d == d').
    wc = conv_w.reshape(OC, S).astype(jnp.float32)
    wce = jnp.einsum('os,de->sdoe', wc, jnp.eye(D, dtype=jnp.float32))
    wce = wce.reshape(K, N).astype(compute_dtype)                 # (K, N), ~64 KiB bf16
    bce = jnp.repeat(conv_b.astype(jnp.float32), D).reshape(1, N)  # bce[oc*D+d] = bc[oc]
    wf = fc_w.reshape(1, N).astype(compute_dtype)
    bf = fc_b.reshape(1, 1).astype(jnp.float32)

    x2d = x.reshape(B, K)  # free, contiguous view; no cast, no pad

    TB = _choose_batch_tile(B, K, N, x.dtype.itemsize, compute_dtype.itemsize)
    G = -(-B // TB)

    out2d = pl.pallas_call(
        partial(convkb_kernel, compute_dtype=compute_dtype),
        out_shape=jax.ShapeDtypeStruct((G, TB), jnp.float32),
        grid=(G,),
        in_specs=[
            pl.BlockSpec((TB, K), lambda i: (i, 0)),   # x: streamed, double-buffered
            pl.BlockSpec((K, N), lambda i: (0, 0)),    # weights: resident in VMEM
            pl.BlockSpec((1, N), lambda i: (0, 0)),
            pl.BlockSpec((1, N), lambda i: (0, 0)),
            pl.BlockSpec((1, 1), lambda i: (0, 0)),
        ],
        out_specs=pl.BlockSpec((1, TB), lambda i: (i, 0)),  # lane-dense output rows
        compiler_params=pltpu.CompilerParams(
            dimension_semantics=("parallel",),
            vmem_limit_bytes=32 * 1024 * 1024,
        ),
        cost_estimate=pl.CostEstimate(
            flops=2 * B * K * N + 2 * B * N,
            transcendentals=0,
            bytes_accessed=(B * K * x.dtype.itemsize          # x read
                            + G * TB * 4                      # output write
                            + (K * N + N) * compute_dtype.itemsize
                            + (N + 1) * 4),
        ),
    )(x2d, wce, bce, wf, bf)

    # (G, TB) -> (B, 1); drop any ragged-tail rows.
    return out2d.reshape(G * TB, 1)[:B]


def convkb_reference(x, conv_w, conv_b, fc_w, fc_b, dtype=jnp.float32):
    """Pure-JAX reference. dtype=f32 -> PyTorch semantics; dtype=bf16 -> mirrors
    the kernel's operand-rounding / f32-accumulation path."""
    B, S, D = x.shape
    OC = conv_w.shape[0]
    wc = conv_w.reshape(OC, S).astype(dtype)
    xb = x.astype(dtype)
    h = jnp.einsum('os,bsd->bod', wc, xb,
                   preferred_element_type=jnp.float32,
                   precision=lax.Precision.HIGHEST)
    h = jnp.maximum(h + conv_b.astype(jnp.float32)[None, :, None], 0.0)
    hb = h.reshape(B, OC * D).astype(dtype)
    out = jnp.dot(hb, fc_w.reshape(1, OC * D).astype(dtype).T,
                  preferred_element_type=jnp.float32,
                  precision=lax.Precision.HIGHEST)
    return out + fc_b.reshape(1, 1).astype(jnp.float32)


if __name__ == "__main__":
    # Shapes implied by the module: input_dim D=32, input_seq_len L=8,
    # in_channels=1 (forced by unsqueeze(1)), out_channels OC=4, batch B=2.
    B, S, D, OC = 2, 8, 32, 4

    key = jax.random.PRNGKey(0)
    k1, k2, k3, k4, k5 = jax.random.split(key, 5)
    gain = 1.414

    # Deterministic xavier_uniform-style init (same shapes as the nn.Module).
    bound_c = gain * math.sqrt(6.0 / (1 * S + OC * S))
    conv_w = jax.random.uniform(k1, (OC, 1, 1, S), jnp.float32, -bound_c, bound_c)
    conv_b = jax.random.uniform(k2, (OC,), jnp.float32,
                                -1.0 / math.sqrt(S), 1.0 / math.sqrt(S))
    bound_f = gain * math.sqrt(6.0 / (OC * D + 1))
    fc_w = jax.random.uniform(k3, (1, OC * D), jnp.float32, -bound_f, bound_f)
    fc_b = jax.random.uniform(k4, (1,), jnp.float32,
                              -1.0 / math.sqrt(OC * D), 1.0 / math.sqrt(OC * D))

    x = jax.random.normal(k5, (B, S, D), jnp.float32)

    # Default (bf16-operand, f32-accumulation) path.
    out = convkb_forward(x, conv_w, conv_b, fc_w, fc_b)
    out = jax.block_until_ready(out)
    assert out.shape == (B, 1)

    # Matches a reference that mirrors the kernel's bf16 rounding path.
    ref_match = convkb_reference(x, conv_w, conv_b, fc_w, fc_b, dtype=jnp.bfloat16)
    assert jnp.allclose(out, ref_match, atol=5e-3, rtol=5e-3), (out, ref_match)

    # Full-f32 PyTorch-semantics reference: expect ~0.2-1% deviation from bf16
    # operand rounding (accumulation is f32).
    ref_f32 = convkb_reference(x, conv_w, conv_b, fc_w, fc_b, dtype=jnp.float32)
    assert jnp.allclose(out, ref_f32, atol=5e-2, rtol=5e-2), (out, ref_f32)

    # Opt-out exact-f32 path tracks the f32 reference tightly.
    out_f32 = jax.block_until_ready(
        convkb_forward(x, conv_w, conv_b, fc_w, fc_b, compute_dtype=jnp.float32))
    assert jnp.allclose(out_f32, ref_f32, atol=5e-3, rtol=5e-3), (out_f32, ref_f32)

    print("KERNEL_OK")
</pallas_src>

<mosaic_0001>
module attributes {stable_mosaic.version = 11 : i64} {
  func.func @convkb_kernel(%arg0: i32, %arg1: memref<2x256xf32, #tpu.memory_space<vmem>>, %arg2: memref<256x128xbf16, #tpu.memory_space<vmem>>, %arg3: memref<1x128xf32, #tpu.memory_space<vmem>>, %arg4: memref<1x128xbf16, #tpu.memory_space<vmem>>, %arg5: memref<1x1xf32, #tpu.memory_space<vmem>>, %arg6: memref<1x2xf32, #tpu.memory_space<vmem>>) attributes {dimension_semantics = [#tpu.dimension_semantics<parallel>], iteration_bounds = array<i64: 1>, scalar_prefetch = 0 : i64, scratch_operands = 0 : i64, tpu.core_type = #tpu.core_type<tc>, window_params = [{transform_indices = @transform_0, window_bounds = array<i64: 2, 256>}, {pipeline_mode = #tpu.pipeline_mode<synchronous>, transform_indices = @transform_1, window_bounds = array<i64: 256, 128>}, {pipeline_mode = #tpu.pipeline_mode<synchronous>, transform_indices = @transform_2, window_bounds = array<i64: 1, 128>}, {pipeline_mode = #tpu.pipeline_mode<synchronous>, transform_indices = @transform_3, window_bounds = array<i64: 1, 128>}, {pipeline_mode = #tpu.pipeline_mode<synchronous>, transform_indices = @transform_4, window_bounds = array<i64: 1, 1>}, {transform_indices = @transform_5, window_bounds = array<i64: 1, 2>}]} {
    %c0 = arith.constant 0 : index
    %c0_0 = arith.constant 0 : index
    %0 = vector.load %arg1[%c0, %c0_0] : memref<2x256xf32, #tpu.memory_space<vmem>>, vector<2x256xf32>
    %1 = arith.truncf %0 : vector<2x256xf32> to vector<2x256xbf16>
    %c0_1 = arith.constant 0 : index
    %c0_2 = arith.constant 0 : index
    %2 = vector.load %arg2[%c0_1, %c0_2] : memref<256x128xbf16, #tpu.memory_space<vmem>>, vector<256x128xbf16>
    %cst = arith.constant dense<0.000000e+00> : vector<2x128xf32>
    %3 = tpu.matmul %1, %2, %cst {dimension_numbers = #tpu.dot_dimension_numbers<[1], [0], [0], [1], [0, 0, 1, 1], [], []>} : vector<2x256xbf16>, vector<256x128xbf16>, vector<2x128xf32> -> vector<2x128xf32>
    %c0_3 = arith.constant 0 : index
    %c0_4 = arith.constant 0 : index
    %4 = vector.load %arg3[%c0_3, %c0_4] : memref<1x128xf32, #tpu.memory_space<vmem>>, vector<1x128xf32>
    %5 = vector.broadcast %4 : vector<1x128xf32> to vector<2x128xf32>
    %6 = arith.addf %3, %5 : vector<2x128xf32>
    %cst_5 = arith.constant 0.000000e+00 : f32
    %7 = vector.broadcast %cst_5 : f32 to vector<2x128xf32>
    %8 = arith.maximumf %6, %7 : vector<2x128xf32>
    %9 = arith.truncf %8 : vector<2x128xf32> to vector<2x128xbf16>
    %c0_6 = arith.constant 0 : index
    %c0_7 = arith.constant 0 : index
    %10 = vector.load %arg4[%c0_6, %c0_7] : memref<1x128xbf16, #tpu.memory_space<vmem>>, vector<1x128xbf16>
    %cst_8 = arith.constant dense<0.000000e+00> : vector<1x2xf32>
    %11 = tpu.matmul %10, %9, %cst_8 {dimension_numbers = #tpu.dot_dimension_numbers<[1], [1], [0], [0], [0, 0, 1, 0], [], []>} : vector<1x128xbf16>, vector<2x128xbf16>, vector<1x2xf32> -> vector<1x2xf32>
    %c0_9 = arith.constant 0 : index
    %c0_10 = arith.constant 0 : index
    %12 = vector.load %arg5[%c0_9, %c0_10] : memref<1x1xf32, #tpu.memory_space<vmem>>, vector<1x1xf32>
    %13 = vector.broadcast %12 : vector<1x1xf32> to vector<1x2xf32>
    %14 = arith.addf %11, %13 : vector<1x2xf32>
    %c0_11 = arith.constant 0 : index
    %c0_12 = arith.constant 0 : index
    %15 = vector.load %arg6[%c0_11, %c0_12] : memref<1x2xf32, #tpu.memory_space<vmem>>, vector<1x2xf32>
    tpu.vector_store %arg6[%c0_11, %c0_12], %14 {strides = array<i32>} : memref<1x2xf32, #tpu.memory_space<vmem>>, vector<1x2xf32>,
    return
  }
  func.func @transform_0(%arg0: i32) -> (i32, i32) {
    %c0_i32 = arith.constant 0 : i32
    %c0_i32_0 = arith.constant 0 : i32
    return %arg0, %c0_i32 : i32, i32
  }
  func.func @transform_1(%arg0: i32) -> (i32, i32) {
    %c0_i32 = arith.constant 0 : i32
    %c0_i32_0 = arith.constant 0 : i32
    %c0_i32_1 = arith.constant 0 : i32
    return %c0_i32, %c0_i32_0 : i32, i32
  }
  func.func @transform_2(%arg0: i32) -> (i32, i32) {
    %c0_i32 = arith.constant 0 : i32
    %c0_i32_0 = arith.constant 0 : i32
    %c0_i32_1 = arith.constant 0 : i32
    return %c0_i32, %c0_i32_0 : i32, i32
  }
  func.func @transform_3(%arg0: i32) -> (i32, i32) {
    %c0_i32 = arith.constant 0 : i32
    %c0_i32_0 = arith.constant 0 : i32
    %c0_i32_1 = arith.constant 0 : i32
    return %c0_i32, %c0_i32_0 : i32, i32
  }
  func.func @transform_4(%arg0: i32) -> (i32, i32) {
    %c0_i32 = arith.constant 0 : i32
    %c0_i32_0 = arith.constant 0 : i32
    %c0_i32_1 = arith.constant 0 : i32
    return %c0_i32, %c0_i32_0 : i32, i32
  }
  func.func @transform_5(%arg0: i32) -> (i32, i32) {
    %c0_i32 = arith.constant 0 : i32
    %c0_i32_0 = arith.constant 0 : i32
    return %arg0, %c0_i32 : i32, i32
  }
}

</mosaic_0001>

<llo_original>
// kernel: tpu_custom_call.1
$region0: #{tpu_custom_call.1}
  #allocation0 [shape = 'u32[]', space=smem, size = 0x4, offset = 0x4, fixed_abs, tag = 'smem constant byte address 0x4 - core index']
  #allocation1 [shape = 'u32[72,128]{1,0:T(1,128)}', space=vmem, size = 0x9000, scoped, tag = 'internal scratch']
  #allocation2 [shape = 'f32[1,1]{1,0:T(1,128)S(1)}', space=vmem, size = 0x200, scoped, tag = 'scoped memory for tpu_custom_call.1']
  %s0 = inlined_call_operand.hbm [shape: f32[2,256], index: 0, kind: input, shape index: {}]
  %s1 = inlined_call_operand.hbm [shape: bf16[256,128], index: 1, kind: input, shape index: {}]
  %s2 = inlined_call_operand.vmem [shape: f32[1,128], index: 2, kind: input, shape index: {}]
  %s3 = inlined_call_operand.vmem [shape: bf16[1,128], index: 3, kind: input, shape index: {}]
  %s4 = inlined_call_operand.<no memory space> [shape: f32[1,1], index: 4, kind: input, shape index: {}]
  %s5 = inlined_call_operand.hbm [shape: f32[1,2], index: 5, kind: output, shape index: {}]
  %s6 = sld [smem:[#allocation0]]
  $region38: #{tpu_custom_call.1} parent=0
    _
  %s8 = ssub.s32 1, %s6
  %s9 = scalar_select 0, %s8, %s6
  %v10 = vstv %s4
  %11 = vst [vmem:[#allocation2] sm:$0x1] %v10
  $region1: #{tpu_custom_call.1} parent=0
    #allocation3 [shape = 'u8[2048]{0}', space=vmem, size = 0x800, scoped, tag = 'input window, operand 0, single buffered']
    #allocation4 [shape = 's32[1]{0}', space=sflag, size = 0x4, scoped, tag = 'scoped memory for tpu_custom_call.1']
    #allocation5 [shape = 's32[1]{0}', space=sflag, size = 0x4, scoped, tag = 'scoped memory for tpu_custom_call.1']
    #allocation6 [shape = 'u8[65536]{0}', space=vmem, size = 0x10000, scoped, tag = 'input window, operand 1, single buffered']
    #allocation7 [shape = 's32[1]{0}', space=sflag, size = 0x4, scoped, tag = 'scoped memory for tpu_custom_call.1']
    #allocation8 [shape = 'u8[512]{0}', space=vmem, size = 0x400, scoped, tag = 'output window, operand 0, single buffered']
    %12 = vsyncpa [#allocation4], 0
    %13 = vsyncpa [#allocation7], 0
    %14 = vsyncpa [#allocation5], 0
    // Predicated region
    $region2: #{tpu_custom_call.1} parent=1 // pred_check
      _
    $region3: #{tpu_custom_call.1} parent=1 // pred_check_branch
      %16 = sbr.rel (0) target = $region5
    $region4: #{tpu_custom_call.1} parent=1 // pred_region
      %18 = vsyncadd [#allocation4], 0
      %s20 = sshll.u32 %s0, 4
      %s21 = int_to_ptr.hbm [resolvable:$true] %s20
      %s22 = sshll.u32 [#allocation3], 4
      %s23 = int_to_ptr.vmem [resolvable:$true] %s22
      %25 = dma.hbm_to_vmem [thread:$0]  %s21, 64, %s23, [#allocation4]
    $region5: #{tpu_custom_call.1} parent=1 // pred_fallthru
      _
    // Predicated region
    $region6: #{tpu_custom_call.1} parent=1 // pred_check
      _
    $region7: #{tpu_custom_call.1} parent=1 // pred_check_branch
      %27 = sbr.rel (0) target = $region9
    $region8: #{tpu_custom_call.1} parent=1 // pred_region
      %29 = vsyncadd [#allocation7], 0
      %s30 = sshll.u32 %s1, 4
      %s31 = int_to_ptr.hbm [resolvable:$true] %s30
      %s32 = sshll.u32 [#allocation6], 4
      %s33 = int_to_ptr.vmem [resolvable:$true] %s32
      %38 = dma.hbm_to_vmem [thread:$0]  %s31, 2048, %s33, [#allocation7], 64, 64, 4
    $region9: #{tpu_custom_call.1} parent=1 // pred_fallthru
      _
    // Predicated region
    $region10: #{tpu_custom_call.1} parent=1 // pred_check
      _
    $region11: #{tpu_custom_call.1} parent=1 // pred_check_branch
      %40 = sbr.rel (0) target = $region13
    $region12: #{tpu_custom_call.1} parent=1 // pred_region
      _
    $region13: #{tpu_custom_call.1} parent=1 // pred_fallthru
      _
    // Predicated region
    $region14: #{tpu_custom_call.1} parent=1 // pred_check
      _
    $region15: #{tpu_custom_call.1} parent=1 // pred_check_branch
      %42 = sbr.rel (0) target = $region17
    $region16: #{tpu_custom_call.1} parent=1 // pred_region
      _
    $region17: #{tpu_custom_call.1} parent=1 // pred_fallthru
      _
    // Predicated region
    $region18: #{tpu_custom_call.1} parent=1 // pred_check
      _
    $region19: #{tpu_custom_call.1} parent=1 // pred_check_branch
      %44 = sbr.rel (0) target = $region21
    $region20: #{tpu_custom_call.1} parent=1 // pred_region
      _
    $region21: #{tpu_custom_call.1} parent=1 // pred_fallthru
      _
    // Predicated region
    $region22: #{tpu_custom_call.1} parent=1 // pred_check
      _
    $region23: #{tpu_custom_call.1} parent=1 // pred_check_branch
      %46 = sbr.rel (0) target = $region25
    $region24: #{tpu_custom_call.1} parent=1 // pred_region
      %48 = dma.done [#allocation4], 64
    $region25: #{tpu_custom_call.1} parent=1 // pred_fallthru
      _
    // Predicated region
    $region26: #{tpu_custom_call.1} parent=1 // pred_check
      _
    $region27: #{tpu_custom_call.1} parent=1 // pred_check_branch
      %50 = sbr.rel (0) target = $region29
    $region28: #{tpu_custom_call.1} parent=1 // pred_region
      %52 = dma.done [#allocation7], 2048
    $region29: #{tpu_custom_call.1} parent=1 // pred_fallthru
      _
    %v54 = vld [vmem:[#allocation3] sm:$0xf]
    %56 = vst [vmem:[#allocation1] ss:$4 sm:$0xff] %v54
    %v57 = vld.sshfl [vmem:[#allocation1] sm:$0xff pattern:$0x73625140]
    %v58 = vld.sshfl [vmem:[#allocation1 + $0x8] sm:$0xff pattern:$0x73625140]
    %v61 = vpack.c.bf16 %v57, %v57
    %v62 = vpack.c.bf16 %v58, %v58
    %v63 = vld [vmem:[#allocation6] sm:$0xf]
    %v64 = vld [vmem:[#allocation6 + $0x4] sm:$0xf]
    %v65 = vld [vmem:[#allocation6 + $0x8] sm:$0xf]
    %v66 = vld [vmem:[#allocation6 + $0xc] sm:$0xf]
    %v67 = vld [vmem:[#allocation6 + $0x10] sm:$0xf]
    %v68 = vld [vmem:[#allocation6 + $0x14] sm:$0xf]
    %v69 = vld [vmem:[#allocation6 + $0x18] sm:$0xf]
    %v70 = vld [vmem:[#allocation6 + $0x1c] sm:$0xf]
    %v71 = vld [vmem:[#allocation6 + $0x20] sm:$0xf]
    %v72 = vld [vmem:[#allocation6 + $0x24] sm:$0xf]
    %v73 = vld [vmem:[#allocation6 + $0x28] sm:$0xf]
    %v74 = vld [vmem:[#allocation6 + $0x2c] sm:$0xf]
    %v75 = vld [vmem:[#allocation6 + $0x30] sm:$0xf]
    %v76 = vld [vmem:[#allocation6 + $0x34] sm:$0xf]
    %v77 = vld [vmem:[#allocation6 + $0x38] sm:$0xf]
    %v78 = vld [vmem:[#allocation6 + $0x3c] sm:$0xf]
    %v79 = vld [vmem:[#allocation6 + $0x40] sm:$0xf]
    %v80 = vld [vmem:[#allocation6 + $0x44] sm:$0xf]
    %v81 = vld [vmem:[#allocation6 + $0x48] sm:$0xf]
    %v82 = vld [vmem:[#allocation6 + $0x4c] sm:$0xf]
    %v83 = vld [vmem:[#allocation6 + $0x50] sm:$0xf]
    %v84 = vld [vmem:[#allocation6 + $0x54] sm:$0xf]
    %v85 = vld [vmem:[#allocation6 + $0x58] sm:$0xf]
    %v86 = vld [vmem:[#allocation6 + $0x5c] sm:$0xf]
    %v87 = vld [vmem:[#allocation6 + $0x60] sm:$0xf]
    %v88 = vld [vmem:[#allocation6 + $0x64] sm:$0xf]
    %v89 = vld [vmem:[#allocation6 + $0x68] sm:$0xf]
    %v90 = vld [vmem:[#allocation6 + $0x6c] sm:$0xf]
    %v91 = vld [vmem:[#allocation6 + $0x70] sm:$0xf]
    %v92 = vld [vmem:[#allocation6 + $0x74] sm:$0xf]
    %v93 = vld [vmem:[#allocation6 + $0x78] sm:$0xf]
    %v94 = vld [vmem:[#allocation6 + $0x7c] sm:$0xf]
    %v95 = vld [vmem:[%s2] sm:$0x1]
    %v97 = vperm.slane %v95, 0
    %v131 = vunpack.c.l.b16 %v63
    %v132 = vunpack.c.l.b16 %v64
    %v133 = vunpack.c.l.b16 %v65
    %v134 = vunpack.c.l.b16 %v66
    %v135 = vunpack.c.l.b16 %v67
    %v136 = vunpack.c.l.b16 %v68
    %v137 = vunpack.c.l.b16 %v69
    %v138 = vunpack.c.l.b16 %v70
    %v139 = vunpack.c.l.b16 %v71
    %v140 = vunpack.c.l.b16 %v72
    %v141 = vunpack.c.l.b16 %v73
    %v142 = vunpack.c.l.b16 %v74
    %v143 = vunpack.c.l.b16 %v75
    %v144 = vunpack.c.l.b16 %v76
    %v145 = vunpack.c.l.b16 %v77
    %v146 = vunpack.c.l.b16 %v78
    %v147 = vunpack.c.l.b16 %v79
    %v148 = vunpack.c.l.b16 %v80
    %v149 = vunpack.c.l.b16 %v81
    %v150 = vunpack.c.l.b16 %v82
    %v151 = vunpack.c.l.b16 %v83
    %v152 = vunpack.c.l.b16 %v84
    %v153 = vunpack.c.l.b16 %v85
    %v154 = vunpack.c.l.b16 %v86
    %v155 = vunpack.c.l.b16 %v87
    %v156 = vunpack.c.l.b16 %v88
    %v157 = vunpack.c.l.b16 %v89
    %v158 = vunpack.c.l.b16 %v90
    %v159 = vunpack.c.l.b16 %v91
    %v160 = vunpack.c.l.b16 %v92
    %v161 = vunpack.c.l.b16 %v93
    %v162 = vunpack.c.l.b16 %v94
    %v163 = vpack.c.b16 %v132, %v131
    %v164 = vpack.c.b16 %v134, %v133
    %v165 = vpack.c.b16 %v136, %v135
    %v166 = vpack.c.b16 %v138, %v137
    %v167 = vpack.c.b16 %v140, %v139
    %v168 = vpack.c.b16 %v142, %v141
    %v169 = vpack.c.b16 %v144, %v143
    %v170 = vpack.c.b16 %v146, %v145
    %v171 = vpack.c.b16 %v148, %v147
    %v172 = vpack.c.b16 %v150, %v149
    %v173 = vpack.c.b16 %v152, %v151
    %v174 = vpack.c.b16 %v154, %v153
    %v175 = vpack.c.b16 %v156, %v155
    %v176 = vpack.c.b16 %v158, %v157
    %v177 = vpack.c.b16 %v160, %v159
    %v178 = vpack.c.b16 %v162, %v161
    %195 = vmatpush.bf16.msra.mxu0 %v170
    %196 = vmatpush.bf16.msra.mxu0 %v169
    %197 = vmatpush.bf16.msra.mxu0 %v168
    %198 = vmatpush.bf16.msra.mxu0 %v167
    %199 = vmatpush.bf16.msra.mxu0 %v166
    %200 = vmatpush.bf16.msra.mxu0 %v165
    %201 = vmatpush.bf16.msra.mxu0 %v164
    %202 = vmatpush.bf16.msra.mxu0 %v163
    %203 = vmatmul.bf16.gmra.mxu0 %v61
    %v204 = vpop.f32.mrf.mxu0
    %v205 = vadd.f32 %v97, %v204
    %v206 = vpop.f32.mrf.mxu0
    %207 = vdwg.mxu0
    %208 = vmatpush.bf16.msra.mxu0 %v178
    %209 = vmatpush.bf16.msra.mxu0 %v177
    %210 = vmatpush.bf16.msra.mxu0 %v176
    %211 = vmatpush.bf16.msra.mxu0 %v175
    %212 = vmatpush.bf16.msra.mxu0 %v174
    %213 = vmatpush.bf16.msra.mxu0 %v173
    %214 = vmatpush.bf16.msra.mxu0 %v172
    %215 = vmatpush.bf16.msra.mxu0 %v171
    %216 = vmatmul.bf16.gmra.mxu0 %v62
    %v217 = vpop.f32.mrf.mxu0
    %v218 = vadd.f32 %v205, %v217
    %v219 = vpop.f32.mrf.mxu0
    %220 = vdwg.mxu0
    %v221 = vmax.f32 %v218, 0.0
    %v222 = vpack.c.bf16 %v221, %v221
    %v223 = vld [vmem:[%s3] sm:$0x1]
    %v224 = vld [vmem:[#allocation2] sm:$0x1]
    %226 = vset.pattern.permute.xlu0 0
    %227 = vperm.xlu0 %226, %v224
    %v228 = vpop.permute.xlu0 %227
    %v230 = vperm.slane %v228, 0
    %231 = vmatpush.bf16.xpose.msra.mxu0 0
    %232 = vmatpush.bf16.xpose.msra.mxu0 0
    %233 = vmatpush.bf16.xpose.msra.mxu0 0
    %234 = vmatpush.bf16.xpose.msra.mxu0 0
    %235 = vmatpush.bf16.xpose.msra.mxu0 0
    %236 = vmatpush.bf16.xpose.msra.mxu0 0
    %237 = vmatpush.bf16.xpose.msra.mxu0 0
    %238 = vmatpush.bf16.xpose.msra.mxu0 %v222
    %239 = vmatmul.bf16.gmra.mxu0 %v223
    %v240 = vpop.f32.mrf.mxu0
    %v241 = vadd.f32 %v230, %v240
    %v242 = vpop.f32.mrf.mxu0
    %243 = vdwg.mxu0
    %vm244 = vcmask 8192
    %245 = vst.msk [vmem:[#allocation8] sm:$0x1] %vm244, %v241
    // Predicated region
    $region30: #{tpu_custom_call.1} parent=1 // pred_check
      _
    $region31: #{tpu_custom_call.1} parent=1 // pred_check_branch
      %247 = sbr.rel (0) target = $region33
    $region32: #{tpu_custom_call.1} parent=1 // pred_region
      %249 = vsyncadd [#allocation5], 0
      %s251 = sshll.u32 [#allocation8], 4
      %s252 = int_to_ptr.vmem [resolvable:$true] %s251
      %s253 = sshll.u32 %s5, 4
      %s254 = int_to_ptr.hbm [resolvable:$true] %s253
      %256 = dma.vmem_to_hbm [thread:$0]  %s252, 16, %s254, [#allocation5]
    $region33: #{tpu_custom_call.1} parent=1 // pred_fallthru
      _
    // Predicated region
    $region34: #{tpu_custom_call.1} parent=1 // pred_check
      _
    $region35: #{tpu_custom_call.1} parent=1 // pred_check_branch
      %258 = sbr.rel (0) target = $region37
    $region36: #{tpu_custom_call.1} parent=1 // pred_region
      %260 = dma.done [#allocation5], 16
    $region37: #{tpu_custom_call.1} parent=1 // pred_fallthru
      _
    %261 = vsyncpa [#allocation4], 1
    %262 = vsyncpa [#allocation7], 1
    %263 = vsyncpa [#allocation5], 1

</llo_original>
